<compile_context>
chip_gen: v7x
topology: tpu7x:2x2x1
jax: 0.10.0
libtpu: 0.0.40
codegen_flags: <defaults>
</compile_context>

<pallas_src>
import functools

import jax
import jax.numpy as jnp
from jax.experimental import pallas as pl
from jax.experimental.pallas import tpu as pltpu

RMS_EPS = 1e-8   # Voltron RMSNorm eps
LANE = 128       # TPU lane width


def _round_up(n: int, m: int) -> int:
    return ((n + m - 1) // m) * m


# --------------------------------------------------------------------------
# Kernel
# --------------------------------------------------------------------------
def _mlp_adapter_kernel(x_ref,            # (TB, OD_PAD) f32   first half of concat (x)
                        e_ref,            # (TB, OD_PAD) f32   second half (init_embed)
                        w1_ref, b1_ref,   # (E_PAD, 2*H_PAD) bf16, (1, 2*H_PAD) f32   fused SwishGLU proj
                        w2_ref, b2_ref,   # (H_PAD, E_PAD)  bf16, (1, E_PAD)  f32     output Linear
                        g_ref,            # (1, E_PAD) f32    RMSNorm gain
                        o_ref,            # (TB, E_PAD) f32
                        *, e_true: float):
    # torch.cat([x, init_embed], -1): lane-aligned (vreg boundary) concat, free-ish.
    xc = jnp.concatenate([x_ref[...], e_ref[...]], axis=-1)        # (TB, E_PAD) f32
    xb = xc.astype(jnp.bfloat16)                                   # MXU operand

    # Fused SwishGLU input projection: one lane-dense MXU push, f32 accumulation.
    h = jnp.dot(xb, w1_ref[...], preferred_element_type=jnp.float32) + b1_ref[...]
    hp = h.shape[-1] // 2                                          # = H_PAD (vreg boundary)
    proj = h[:, :hp]                                               # tensor_split first chunk
    gate = h[:, hp:]                                               # tensor_split second chunk
    act = proj * (gate * jax.nn.sigmoid(gate))                     # proj * SiLU(gate), f32 (padded cols stay 0)

    # MLP output projection.
    y = jnp.dot(act.astype(jnp.bfloat16), w2_ref[...],
                preferred_element_type=jnp.float32) + b2_ref[...]

    # Residual + Voltron RMSNorm (clamp moved onto sum_sq; padded lanes are 0 so
    # they contribute nothing to sum_sq and produce 0 output):
    #   out = z / max(||z|| * E^-0.5, eps) * g
    #       = z * sqrt(E) * rsqrt(max(sum_sq, eps^2 * E)) * g
    z = xc + y
    sum_sq = jnp.sum(z * z, axis=-1, keepdims=True)
    inv = jax.lax.rsqrt(jnp.maximum(sum_sq, (RMS_EPS * RMS_EPS) * e_true))
    inv = inv * (e_true ** 0.5)
    o_ref[...] = (z * inv * g_ref[...]).astype(o_ref.dtype)        # lane-dense unmasked store


# --------------------------------------------------------------------------
# One-time parameter preparation (layout + lane padding + bf16 cast)
# --------------------------------------------------------------------------
def prepare_params(params):
    """Convert PyTorch (out, in) weights to lane-padded kernel layout. Call once.

    Feature layout used by the kernel ("split-padded"):
      input features  : x features in rows/lanes [0:obs),   init_embed in [od_pad:od_pad+obs)
      hidden features : proj outputs in cols [0:H),          gate outputs in [H_pad:H_pad+H)
    All pad positions are zeros, so the math (incl. RMSNorm sum_sq) is unchanged.
    """
    w1 = jnp.asarray(params["w1"], jnp.float32)   # (2H, E)  SwishGLU Linear(E, 2H)
    b1 = jnp.asarray(params["b1"], jnp.float32)   # (2H,)
    w2 = jnp.asarray(params["w2"], jnp.float32)   # (E, H)   output Linear(H, E)
    b2 = jnp.asarray(params["b2"], jnp.float32)   # (E,)
    g = jnp.asarray(params["g"], jnp.float32)     # (E,)

    two_h, E = w1.shape
    H = two_h // 2
    obs = E // 2
    od_pad = _round_up(obs, LANE)
    E_pad = 2 * od_pad
    H_pad = _round_up(H, LANE)
    twoH_pad = 2 * H_pad

    # --- w1: (2H, E) -> padded (E_pad, 2*H_pad), rows=input features, cols=proj|gate
    w1_t = w1.T                                   # (E, 2H); cols [0:H]=proj, [H:2H]=gate
    w1_pad = jnp.zeros((E_pad, twoH_pad), jnp.float32)
    w1_pad = w1_pad.at[:obs, :H].set(w1_t[:obs, :H])
    w1_pad = w1_pad.at[od_pad:od_pad + obs, :H].set(w1_t[obs:, :H])
    w1_pad = w1_pad.at[:obs, H_pad:H_pad + H].set(w1_t[:obs, H:])
    w1_pad = w1_pad.at[od_pad:od_pad + obs, H_pad:H_pad + H].set(w1_t[obs:, H:])

    b1_pad = jnp.zeros((twoH_pad,), jnp.float32)
    b1_pad = b1_pad.at[:H].set(b1[:H]).at[H_pad:H_pad + H].set(b1[H:])

    # --- w2: (E, H) -> padded (H_pad, E_pad), rows=hidden (proj) features, cols=output features
    w2_t = w2.T                                   # (H, E)
    w2_pad = jnp.zeros((H_pad, E_pad), jnp.float32)
    w2_pad = w2_pad.at[:H, :obs].set(w2_t[:, :obs])
    w2_pad = w2_pad.at[:H, od_pad:od_pad + obs].set(w2_t[:, obs:])

    def remap_out(v):                             # (E,) -> (E_pad,), zeros in pad lanes
        out = jnp.zeros((E_pad,), v.dtype)
        return out.at[:obs].set(v[:obs]).at[od_pad:od_pad + obs].set(v[obs:])

    return {
        "w1_t": w1_pad.astype(jnp.bfloat16),            # (E_pad, 2*H_pad)
        "b1": b1_pad.reshape(1, twoH_pad),
        "w2_t": w2_pad.astype(jnp.bfloat16),            # (H_pad, E_pad)
        "b2": remap_out(b2).reshape(1, E_pad),
        "g": remap_out(g).reshape(1, E_pad),
    }


# --------------------------------------------------------------------------
# Forward wrapper
# --------------------------------------------------------------------------
def mlp_adapter_forward(x, init_embed, prep):
    """x, init_embed: (B, 1, obs_dim) float32. Returns (B, 2*obs_dim) float32."""
    B, S, obs_dim = x.shape
    assert S == 1, "MLP_Adapter squeezes dim=1; expects a singleton latent dim"
    E = 2 * obs_dim
    od_pad = _round_up(obs_dim, LANE)
    E_pad = 2 * od_pad
    H_pad = prep["w2_t"].shape[0]
    twoH_pad = prep["w1_t"].shape[1]
    assert prep["w1_t"].shape[0] == E_pad and prep["w2_t"].shape[1] == E_pad

    xs = x.reshape(B, obs_dim).astype(jnp.float32)
    es = init_embed.reshape(B, obs_dim).astype(jnp.float32)

    # Batch tiling: large sublane-aligned tiles to amortize per-step overhead,
    # but keep >=2 tiles for big B so the parallel grid axis uses both v7x TCs.
    if B <= 8:
        tile_b = _round_up(B, 8)
    else:
        tile_b = min(512, _round_up(-(-B // 2), 8))
    Bp = _round_up(B, tile_b)

    pad_rows = Bp - B
    pad_lanes = od_pad - obs_dim
    if pad_rows or pad_lanes:
        # Only emitted when obs_dim is not a 128 multiple or B is not a tile multiple;
        # pads are zeros so padded lanes/rows stay exactly zero through the kernel.
        xs = jnp.pad(xs, ((0, pad_rows), (0, pad_lanes)))
        es = jnp.pad(es, ((0, pad_rows), (0, pad_lanes)))
    grid = (Bp // tile_b,)

    # VMEM budget derived from actual requirements (default double-buffering of
    # every input/output block included), capped at 48 MiB (safe on v5e/v6e/v7x).
    weight_bytes = (prep["w1_t"].size + prep["w2_t"].size) * 2 \
        + (prep["b1"].size + prep["b2"].size + prep["g"].size) * 4
    io_tile_bytes = (2 * tile_b * od_pad + tile_b * E_pad) * 4 * 2      # x, e, out tiles x2 buffers
    interm_bytes = tile_b * (twoH_pad + H_pad + 3 * E_pad) * 4 \
        + tile_b * (E_pad + H_pad) * 2                                  # f32 temporaries + bf16 copies
    needed = 2 * weight_bytes + io_tile_bytes + interm_bytes
    vmem_limit = int(min(max(int(needed * 1.5), 4 << 20), 48 << 20))

    cost = pl.CostEstimate(
        flops=2 * Bp * E_pad * twoH_pad + 2 * Bp * H_pad * E_pad,
        transcendentals=Bp * H_pad + Bp,
        bytes_accessed=2 * Bp * od_pad * 4 + weight_bytes + Bp * E_pad * 4,
    )

    act_in_spec = pl.BlockSpec((tile_b, od_pad), lambda i: (i, 0))
    out_spec = pl.BlockSpec((tile_b, E_pad), lambda i: (i, 0))
    resident = lambda shape: pl.BlockSpec(shape, lambda i: (0, 0))   # VMEM-resident across grid

    out = pl.pallas_call(
        functools.partial(_mlp_adapter_kernel, e_true=float(E)),
        out_shape=jax.ShapeDtypeStruct((Bp, E_pad), jnp.float32),
        grid=grid,
        in_specs=[
            act_in_spec,                      # x tile
            act_in_spec,                      # init_embed tile
            resident((E_pad, twoH_pad)),      # w1_t
            resident((1, twoH_pad)),          # b1
            resident((H_pad, E_pad)),         # w2_t
            resident((1, E_pad)),             # b2
            resident((1, E_pad)),             # g
        ],
        out_specs=out_spec,
        compiler_params=pltpu.CompilerParams(
            dimension_semantics=("parallel",),   # batch tiles shard across v7x's 2 TCs
            vmem_limit_bytes=vmem_limit,
        ),
        cost_estimate=cost,
    )(xs, es, prep["w1_t"], prep["b1"], prep["w2_t"], prep["b2"], prep["g"])

    # Strip lane/batch padding. When obs_dim % 128 == 0 and B % tile_b == 0 this
    # is a no-op view of the kernel output.
    if od_pad == obs_dim:
        return out[:B]
    return jnp.concatenate([out[:B, :obs_dim], out[:B, od_pad:od_pad + obs_dim]], axis=-1)


# --------------------------------------------------------------------------
# Parameter init + pure-JAX reference (mirrors the PyTorch forward)
# --------------------------------------------------------------------------
def init_params(key, obs_dim, mlp_ratio=1.0):
    """PyTorch-layout parameters (weights stored as (out, in), like nn.Linear)."""
    E = 2 * obs_dim
    H = int(mlp_ratio * E)
    k1, k2, k3, k4 = jax.random.split(key, 4)
    scale1 = 1.0 / jnp.sqrt(E)
    scale2 = 1.0 / jnp.sqrt(H)
    return {
        "w1": jax.random.uniform(k1, (2 * H, E), jnp.float32, -scale1, scale1),
        "b1": jax.random.uniform(k2, (2 * H,), jnp.float32, -scale1, scale1),
        "w2": jax.random.uniform(k3, (E, H), jnp.float32, -scale2, scale2),
        "b2": jax.random.uniform(k4, (E,), jnp.float32, -scale2, scale2),
        "g": jnp.ones((E,), jnp.float32),
    }


def _reference(x, init_embed, params, matmul_dtype=jnp.float32):
    """Pure-JAX reference mirroring the PyTorch forward.

    matmul_dtype=jnp.bfloat16 mirrors the kernel's mixed-precision matmuls
    (bf16 operands, f32 accumulation, f32 residual/RMSNorm).
    """
    B = x.shape[0]
    xc = jnp.concatenate([x, init_embed], axis=-1).astype(jnp.float32)   # (B, 1, E)
    E = xc.shape[-1]
    H = params["w1"].shape[0] // 2
    xm = xc.astype(matmul_dtype)
    w1 = params["w1"].astype(matmul_dtype)
    w2 = params["w2"].astype(matmul_dtype)
    h = jnp.dot(xm, w1.T, preferred_element_type=jnp.float32) + params["b1"]
    proj, gate = h[..., :H], h[..., H:]
    act = proj * (gate * jax.nn.sigmoid(gate))
    y = jnp.dot(act.astype(matmul_dtype), w2.T,
                preferred_element_type=jnp.float32) + params["b2"]
    z = xc + y
    norm = jnp.sqrt(jnp.sum(z * z, axis=-1, keepdims=True)) * (float(E) ** -0.5)
    out = z / jnp.maximum(norm, RMS_EPS) * params["g"]
    return out.reshape(B, E)


if __name__ == "__main__":
    key = jax.random.PRNGKey(0)
    k_x, k_e, k_p = jax.random.split(key, 3)

    B, obs_dim = 2, 16                       # E = 32, H = 32
    x = jax.random.normal(k_x, (B, 1, obs_dim), jnp.float32)
    init_embed = jax.random.normal(k_e, (B, 1, obs_dim), jnp.float32)
    params = init_params(k_p, obs_dim, mlp_ratio=1.0)

    prep = prepare_params(params)            # one-time lane-padded bf16 weight re-layout
    forward = jax.jit(mlp_adapter_forward)

    out = forward(x, init_embed, prep)
    jax.block_until_ready(out)
    assert out.shape == (B, 2 * obs_dim)

    # Tight check vs a reference that mirrors the kernel's bf16-matmul / f32-acc math.
    ref_bf16 = _reference(x, init_embed, params, matmul_dtype=jnp.bfloat16)
    assert jnp.allclose(out, ref_bf16, atol=1e-3, rtol=1e-3), "mismatch vs bf16 reference"

    # Looser sanity check vs the full-f32 PyTorch-equivalent reference.
    ref_f32 = _reference(x, init_embed, params, matmul_dtype=jnp.float32)
    assert jnp.allclose(out, ref_f32, atol=5e-2, rtol=5e-2), "mismatch vs f32 reference"

    print("KERNEL_OK")
</pallas_src>

<mosaic_0001>
module attributes {stable_mosaic.version = 11 : i64} {
  func.func @_mlp_adapter_kernel(%arg0: i32, %arg1: memref<8x128xf32, #tpu.memory_space<vmem>>, %arg2: memref<8x128xf32, #tpu.memory_space<vmem>>, %arg3: memref<256x256xbf16, #tpu.memory_space<vmem>>, %arg4: memref<1x256xf32, #tpu.memory_space<vmem>>, %arg5: memref<128x256xbf16, #tpu.memory_space<vmem>>, %arg6: memref<1x256xf32, #tpu.memory_space<vmem>>, %arg7: memref<1x256xf32, #tpu.memory_space<vmem>>, %arg8: memref<8x256xf32, #tpu.memory_space<vmem>>) attributes {dimension_semantics = [#tpu.dimension_semantics<parallel>], iteration_bounds = array<i64: 1>, scalar_prefetch = 0 : i64, scratch_operands = 0 : i64, tpu.core_type = #tpu.core_type<tc>, window_params = [{transform_indices = @transform_0, window_bounds = array<i64: 8, 128>}, {transform_indices = @transform_1, window_bounds = array<i64: 8, 128>}, {pipeline_mode = #tpu.pipeline_mode<synchronous>, transform_indices = @transform_2, window_bounds = array<i64: 256, 256>}, {pipeline_mode = #tpu.pipeline_mode<synchronous>, transform_indices = @transform_3, window_bounds = array<i64: 1, 256>}, {pipeline_mode = #tpu.pipeline_mode<synchronous>, transform_indices = @transform_4, window_bounds = array<i64: 128, 256>}, {pipeline_mode = #tpu.pipeline_mode<synchronous>, transform_indices = @transform_5, window_bounds = array<i64: 1, 256>}, {pipeline_mode = #tpu.pipeline_mode<synchronous>, transform_indices = @transform_6, window_bounds = array<i64: 1, 256>}, {transform_indices = @transform_7, window_bounds = array<i64: 8, 256>}]} {
    %c0 = arith.constant 0 : index
    %c0_0 = arith.constant 0 : index
    %0 = vector.load %arg1[%c0, %c0_0] : memref<8x128xf32, #tpu.memory_space<vmem>>, vector<8x128xf32>
    %c0_1 = arith.constant 0 : index
    %c0_2 = arith.constant 0 : index
    %1 = vector.load %arg2[%c0_1, %c0_2] : memref<8x128xf32, #tpu.memory_space<vmem>>, vector<8x128xf32>
    %2 = tpu.concatenate %0, %1 in 1 : vector<8x128xf32>, vector<8x128xf32> -> vector<8x256xf32>
    %3 = arith.truncf %2 : vector<8x256xf32> to vector<8x256xbf16>
    %c0_3 = arith.constant 0 : index
    %c0_4 = arith.constant 0 : index
    %4 = vector.load %arg3[%c0_3, %c0_4] : memref<256x256xbf16, #tpu.memory_space<vmem>>, vector<256x256xbf16>
    %cst = arith.constant dense<0.000000e+00> : vector<8x256xf32>
    %5 = tpu.matmul %3, %4, %cst {dimension_numbers = #tpu.dot_dimension_numbers<[1], [0], [0], [1], [0, 0, 1, 1], [], []>} : vector<8x256xbf16>, vector<256x256xbf16>, vector<8x256xf32> -> vector<8x256xf32>
    %c0_5 = arith.constant 0 : index
    %c0_6 = arith.constant 0 : index
    %6 = vector.load %arg4[%c0_5, %c0_6] : memref<1x256xf32, #tpu.memory_space<vmem>>, vector<1x256xf32>
    %7 = vector.broadcast %6 : vector<1x256xf32> to vector<8x256xf32>
    %8 = arith.addf %5, %7 : vector<8x256xf32>
    %9 = vector.extract_strided_slice %8 {offsets = [0, 0], sizes = [8, 128], strides = [1, 1]} : vector<8x256xf32> to vector<8x128xf32>
    %10 = vector.extract_strided_slice %8 {offsets = [0, 128], sizes = [8, 128], strides = [1, 1]} : vector<8x256xf32> to vector<8x128xf32>
    %11 = arith.negf %10 : vector<8x128xf32>
    %12 = math.exp %11 : vector<8x128xf32>
    %cst_7 = arith.constant 1.000000e+00 : f32
    %13 = vector.broadcast %cst_7 : f32 to vector<8x128xf32>
    %14 = arith.addf %13, %12 : vector<8x128xf32>
    %15 = arith.divf %13, %14 : vector<8x128xf32>
    %16 = arith.mulf %10, %15 : vector<8x128xf32>
    %17 = arith.mulf %9, %16 : vector<8x128xf32>
    %18 = arith.truncf %17 : vector<8x128xf32> to vector<8x128xbf16>
    %c0_8 = arith.constant 0 : index
    %c0_9 = arith.constant 0 : index
    %19 = vector.load %arg5[%c0_8, %c0_9] : memref<128x256xbf16, #tpu.memory_space<vmem>>, vector<128x256xbf16>
    %cst_10 = arith.constant dense<0.000000e+00> : vector<8x256xf32>
    %20 = tpu.matmul %18, %19, %cst_10 {dimension_numbers = #tpu.dot_dimension_numbers<[1], [0], [0], [1], [0, 0, 1, 1], [], []>} : vector<8x128xbf16>, vector<128x256xbf16>, vector<8x256xf32> -> vector<8x256xf32>
    %c0_11 = arith.constant 0 : index
    %c0_12 = arith.constant 0 : index
    %21 = vector.load %arg6[%c0_11, %c0_12] : memref<1x256xf32, #tpu.memory_space<vmem>>, vector<1x256xf32>
    %22 = vector.broadcast %21 : vector<1x256xf32> to vector<8x256xf32>
    %23 = arith.addf %20, %22 : vector<8x256xf32>
    %24 = arith.addf %2, %23 : vector<8x256xf32>
    %25 = arith.mulf %24, %24 : vector<8x256xf32>
    %cst_13 = arith.constant dense<0.000000e+00> : vector<8xf32>
    %26 = vector.multi_reduction <add>, %25, %cst_13 [1] : vector<8x256xf32> to vector<8xf32>
    %27 = vector.shape_cast %26 : vector<8xf32> to vector<8x1xf32>
    %cst_14 = arith.constant 3.200000e-15 : f32
    %28 = vector.broadcast %cst_14 : f32 to vector<8x1xf32>
    %29 = arith.maximumf %27, %28 : vector<8x1xf32>
    %30 = math.rsqrt %29 : vector<8x1xf32>
    %cst_15 = arith.constant 5.65685415 : f32
    %31 = vector.broadcast %cst_15 : f32 to vector<8x1xf32>
    %32 = arith.mulf %30, %31 : vector<8x1xf32>
    %33 = vector.broadcast %32 : vector<8x1xf32> to vector<8x256xf32>
    %34 = arith.mulf %24, %33 : vector<8x256xf32>
    %c0_16 = arith.constant 0 : index
    %c0_17 = arith.constant 0 : index
    %35 = vector.load %arg7[%c0_16, %c0_17] : memref<1x256xf32, #tpu.memory_space<vmem>>, vector<1x256xf32>
    %36 = vector.broadcast %35 : vector<1x256xf32> to vector<8x256xf32>
    %37 = arith.mulf %34, %36 : vector<8x256xf32>
    %c0_18 = arith.constant 0 : index
    %c0_19 = arith.constant 0 : index
    %38 = vector.load %arg8[%c0_18, %c0_19] : memref<8x256xf32, #tpu.memory_space<vmem>>, vector<8x256xf32>
    tpu.vector_store %arg8[%c0_18, %c0_19], %37 {strides = array<i32>} : memref<8x256xf32, #tpu.memory_space<vmem>>, vector<8x256xf32>,
    return
  }
  func.func @transform_0(%arg0: i32) -> (i32, i32) {
    %c0_i32 = arith.constant 0 : i32
    %c0_i32_0 = arith.constant 0 : i32
    return %arg0, %c0_i32 : i32, i32
  }
  func.func @transform_1(%arg0: i32) -> (i32, i32) {
    %c0_i32 = arith.constant 0 : i32
    %c0_i32_0 = arith.constant 0 : i32
    return %arg0, %c0_i32 : i32, i32
  }
  func.func @transform_2(%arg0: i32) -> (i32, i32) {
    %c0_i32 = arith.constant 0 : i32
    %c0_i32_0 = arith.constant 0 : i32
    %c0_i32_1 = arith.constant 0 : i32
    return %c0_i32, %c0_i32_0 : i32, i32
  }
  func.func @transform_3(%arg0: i32) -> (i32, i32) {
    %c0_i32 = arith.constant 0 : i32
    %c0_i32_0 = arith.constant 0 : i32
    %c0_i32_1 = arith.constant 0 : i32
    return %c0_i32, %c0_i32_0 : i32, i32
  }
  func.func @transform_4(%arg0: i32) -> (i32, i32) {
    %c0_i32 = arith.constant 0 : i32
    %c0_i32_0 = arith.constant 0 : i32
    %c0_i32_1 = arith.constant 0 : i32
    return %c0_i32, %c0_i32_0 : i32, i32
  }
  func.func @transform_5(%arg0: i32) -> (i32, i32) {
    %c0_i32 = arith.constant 0 : i32
    %c0_i32_0 = arith.constant 0 : i32
    %c0_i32_1 = arith.constant 0 : i32
    return %c0_i32, %c0_i32_0 : i32, i32
  }
  func.func @transform_6(%arg0: i32) -> (i32, i32) {
    %c0_i32 = arith.constant 0 : i32
    %c0_i32_0 = arith.constant 0 : i32
    %c0_i32_1 = arith.constant 0 : i32
    return %c0_i32, %c0_i32_0 : i32, i32
  }
  func.func @transform_7(%arg0: i32) -> (i32, i32) {
    %c0_i32 = arith.constant 0 : i32
    %c0_i32_0 = arith.constant 0 : i32
    return %arg0, %c0_i32 : i32, i32
  }
}

</mosaic_0001>

<llo_original>
// kernel: mlp_adapter_forward.1
$region0: #{mlp_adapter_forward.1}
  #allocation0 [shape = 'u32[]', space=smem, size = 0x4, offset = 0x4, fixed_abs, tag = 'smem constant byte address 0x4 - core index']
  #allocation1 [shape = 'u32[144,128]{1,0:T(1,128)}', space=vmem, size = 0x12000, scoped, tag = 'internal scratch']
  %s0 = inlined_call_operand.vmem [shape: f32[8,128], index: 0, kind: input, shape index: {}]
  %s1 = inlined_call_operand.vmem [shape: f32[8,128], index: 1, kind: input, shape index: {}]
  %s2 = inlined_call_operand.hbm [shape: bf16[256,256], index: 2, kind: input, shape index: {}]
  %s3 = inlined_call_operand.vmem [shape: f32[1,256], index: 3, kind: input, shape index: {}]
  %s4 = inlined_call_operand.hbm [shape: bf16[128,256], index: 4, kind: input, shape index: {}]
  %s5 = inlined_call_operand.vmem [shape: f32[1,256], index: 5, kind: input, shape index: {}]
  %s6 = inlined_call_operand.vmem [shape: f32[1,256], index: 6, kind: input, shape index: {}]
  %s7 = inlined_call_operand.vmem [shape: f32[8,256], index: 7, kind: output, shape index: {}]
  %s8 = sld [smem:[#allocation0]]
  $region46: #{mlp_adapter_forward.1} parent=0
    _
  %s10 = ssub.s32 1, %s8
  %s11 = scalar_select 0, %s10, %s8
  $region1: #{mlp_adapter_forward.1} parent=0
    #allocation2 [shape = 'u8[131072]{0}', space=vmem, size = 0x20000, scoped, tag = 'input window, operand 2, single buffered']
    #allocation3 [shape = 's32[1]{0}', space=sflag, size = 0x4, scoped, tag = 'scoped memory for mlp_adapter_forward.1']
    #allocation4 [shape = 'u8[65536]{0}', space=vmem, size = 0x10000, scoped, tag = 'input window, operand 4, single buffered']
    #allocation5 [shape = 's32[1]{0}', space=sflag, size = 0x4, scoped, tag = 'scoped memory for mlp_adapter_forward.1']
    %12 = vsyncpa [#allocation3], 0
    %13 = vsyncpa [#allocation5], 0
    // Predicated region
    $region2: #{mlp_adapter_forward.1} parent=1 // pred_check
      _
    $region3: #{mlp_adapter_forward.1} parent=1 // pred_check_branch
      %15 = sbr.rel (0) target = $region5
    $region4: #{mlp_adapter_forward.1} parent=1 // pred_region
      _
    $region5: #{mlp_adapter_forward.1} parent=1 // pred_fallthru
      _
    // Predicated region
    $region6: #{mlp_adapter_forward.1} parent=1 // pred_check
      _
    $region7: #{mlp_adapter_forward.1} parent=1 // pred_check_branch
      %17 = sbr.rel (0) target = $region9
    $region8: #{mlp_adapter_forward.1} parent=1 // pred_region
      _
    $region9: #{mlp_adapter_forward.1} parent=1 // pred_fallthru
      _
    // Predicated region
    $region10: #{mlp_adapter_forward.1} parent=1 // pred_check
      _
    $region11: #{mlp_adapter_forward.1} parent=1 // pred_check_branch
      %19 = sbr.rel (0) target = $region13
    $region12: #{mlp_adapter_forward.1} parent=1 // pred_region
      %s21 = ssub.s32 4096, 4096
      %22 = vsyncadd [#allocation3], %s21
      %s23 = sshll.u32 [#allocation2], 4
      %s24 = int_to_ptr.vmem [resolvable:$true] %s23
      %29 = dma.hbm_to_vmem [thread:$0]  %s2, 4096, %s24, [#allocation3], 128, 128, 8
    $region13: #{mlp_adapter_forward.1} parent=1 // pred_fallthru
      _
    // Predicated region
    $region14: #{mlp_adapter_forward.1} parent=1 // pred_check
      _
    $region15: #{mlp_adapter_forward.1} parent=1 // pred_check_branch
      %31 = sbr.rel (0) target = $region17
    $region16: #{mlp_adapter_forward.1} parent=1 // pred_region
      _
    $region17: #{mlp_adapter_forward.1} parent=1 // pred_fallthru
      _
    // Predicated region
    $region18: #{mlp_adapter_forward.1} parent=1 // pred_check
      _
    $region19: #{mlp_adapter_forward.1} parent=1 // pred_check_branch
      %33 = sbr.rel (0) target = $region21
    $region20: #{mlp_adapter_forward.1} parent=1 // pred_region
      %s35 = ssub.s32 2048, 2048
      %36 = vsyncadd [#allocation5], %s35
      %s37 = sshll.u32 [#allocation4], 4
      %s38 = int_to_ptr.vmem [resolvable:$true] %s37
      %43 = dma.hbm_to_vmem [thread:$0]  %s4, 2048, %s38, [#allocation5], 128, 128, 8
    $region21: #{mlp_adapter_forward.1} parent=1 // pred_fallthru
      _
    // Predicated region
    $region22: #{mlp_adapter_forward.1} parent=1 // pred_check
      _
    $region23: #{mlp_adapter_forward.1} parent=1 // pred_check_branch
      %45 = sbr.rel (0) target = $region25
    $region24: #{mlp_adapter_forward.1} parent=1 // pred_region
      _
    $region25: #{mlp_adapter_forward.1} parent=1 // pred_fallthru
      _
    // Predicated region
    $region26: #{mlp_adapter_forward.1} parent=1 // pred_check
      _
    $region27: #{mlp_adapter_forward.1} parent=1 // pred_check_branch
      %47 = sbr.rel (0) target = $region29
    $region28: #{mlp_adapter_forward.1} parent=1 // pred_region
      _
    $region29: #{mlp_adapter_forward.1} parent=1 // pred_fallthru
      _
    // Predicated region
    $region30: #{mlp_adapter_forward.1} parent=1 // pred_check
      _
    $region31: #{mlp_adapter_forward.1} parent=1 // pred_check_branch
      %49 = sbr.rel (0) target = $region33
    $region32: #{mlp_adapter_forward.1} parent=1 // pred_region
      %50 = dma.done [#allocation3], 4096
    $region33: #{mlp_adapter_forward.1} parent=1 // pred_fallthru
      _
    // Predicated region
    $region34: #{mlp_adapter_forward.1} parent=1 // pred_check
      _
    $region35: #{mlp_adapter_forward.1} parent=1 // pred_check_branch
      %52 = sbr.rel (0) target = $region37
    $region36: #{mlp_adapter_forward.1} parent=1 // pred_region
      %53 = dma.done [#allocation5], 2048
    $region37: #{mlp_adapter_forward.1} parent=1 // pred_fallthru
      _
    %v55 = vld [vmem:[%s0] sm:$0xff]
    %v56 = vld [vmem:[%s1] sm:$0xff]
    %v57 = vpack.c.bf16 %v55, %v55
    %v58 = vpack.c.bf16 %v56, %v56
    %v59 = vld [vmem:[#allocation2] sm:$0xff]
    %v60 = vld [vmem:[#allocation2 + $0x8] sm:$0xff]
    %v61 = vld [vmem:[#allocation2 + $0x10] sm:$0xff]
    %v62 = vld [vmem:[#allocation2 + $0x18] sm:$0xff]
    %v63 = vld [vmem:[#allocation2 + $0x20] sm:$0xff]
    %v64 = vld [vmem:[#allocation2 + $0x28] sm:$0xff]
    %v65 = vld [vmem:[#allocation2 + $0x30] sm:$0xff]
    %v66 = vld [vmem:[#allocation2 + $0x38] sm:$0xff]
    %v67 = vld [vmem:[#allocation2 + $0x40] sm:$0xff]
    %v68 = vld [vmem:[#allocation2 + $0x48] sm:$0xff]
    %v69 = vld [vmem:[#allocation2 + $0x50] sm:$0xff]
    %v70 = vld [vmem:[#allocation2 + $0x58] sm:$0xff]
    %v71 = vld [vmem:[#allocation2 + $0x60] sm:$0xff]
    %v72 = vld [vmem:[#allocation2 + $0x68] sm:$0xff]
    %v73 = vld [vmem:[#allocation2 + $0x70] sm:$0xff]
    %v74 = vld [vmem:[#allocation2 + $0x78] sm:$0xff]
    %v75 = vld [vmem:[#allocation2 + $0x80] sm:$0xff]
    %v76 = vld [vmem:[#allocation2 + $0x88] sm:$0xff]
    %v77 = vld [vmem:[#allocation2 + $0x90] sm:$0xff]
    %v78 = vld [vmem:[#allocation2 + $0x98] sm:$0xff]
    %v79 = vld [vmem:[#allocation2 + $0xa0] sm:$0xff]
    %v80 = vld [vmem:[#allocation2 + $0xa8] sm:$0xff]
    %v81 = vld [vmem:[#allocation2 + $0xb0] sm:$0xff]
    %v82 = vld [vmem:[#allocation2 + $0xb8] sm:$0xff]
    %v83 = vld [vmem:[#allocation2 + $0xc0] sm:$0xff]
    %v84 = vld [vmem:[#allocation2 + $0xc8] sm:$0xff]
    %v85 = vld [vmem:[#allocation2 + $0xd0] sm:$0xff]
    %v86 = vld [vmem:[#allocation2 + $0xd8] sm:$0xff]
    %v87 = vld [vmem:[#allocation2 + $0xe0] sm:$0xff]
    %v88 = vld [vmem:[#allocation2 + $0xe8] sm:$0xff]
    %v89 = vld [vmem:[#allocation2 + $0xf0] sm:$0xff]
    %v90 = vld [vmem:[#allocation2 + $0xf8] sm:$0xff]
    %v91 = vld [vmem:[%s3] sm:$0x3]
    %v93 = vlaneseq
    %v94 = vshrl.u32 %v93, 7
    %v95 = vsub.s32 0, %v94
    %v96 = vrot.slane %v91, %v95
    %v97 = vlaneseq
    %v98 = vshrl.u32 %v97, 7
    %v99 = vsub.s32 1, %v98
    %v100 = vrot.slane %v91, %v99
    %v135 = vunpack.c.l.b16 %v59
    %v136 = vunpack.c.h.b16 %v59
    %v137 = vunpack.c.l.b16 %v60
    %v138 = vunpack.c.h.b16 %v60
    %v139 = vunpack.c.l.b16 %v61
    %v140 = vunpack.c.h.b16 %v61
    %v141 = vunpack.c.l.b16 %v62
    %v142 = vunpack.c.h.b16 %v62
    %v143 = vunpack.c.l.b16 %v63
    %v144 = vunpack.c.h.b16 %v63
    %v145 = vunpack.c.l.b16 %v64
    %v146 = vunpack.c.h.b16 %v64
    %v147 = vunpack.c.l.b16 %v65
    %v148 = vunpack.c.h.b16 %v65
    %v149 = vunpack.c.l.b16 %v66
    %v150 = vunpack.c.h.b16 %v66
    %v151 = vunpack.c.l.b16 %v67
    %v152 = vunpack.c.h.b16 %v67
    %v153 = vunpack.c.l.b16 %v68
    %v154 = vunpack.c.h.b16 %v68
    %v155 = vunpack.c.l.b16 %v69
    %v156 = vunpack.c.h.b16 %v69
    %v157 = vunpack.c.l.b16 %v70
    %v158 = vunpack.c.h.b16 %v70
    %v159 = vunpack.c.l.b16 %v71
    %v160 = vunpack.c.h.b16 %v71
    %v161 = vunpack.c.l.b16 %v72
    %v162 = vunpack.c.h.b16 %v72
    %v163 = vunpack.c.l.b16 %v73
    %v164 = vunpack.c.h.b16 %v73
    %v165 = vunpack.c.l.b16 %v74
    %v166 = vunpack.c.h.b16 %v74
    %v167 = vunpack.c.l.b16 %v75
    %v168 = vunpack.c.h.b16 %v75
    %v169 = vunpack.c.l.b16 %v76
    %v170 = vunpack.c.h.b16 %v76
    %v171 = vunpack.c.l.b16 %v77
    %v172 = vunpack.c.h.b16 %v77
    %v173 = vunpack.c.l.b16 %v78
    %v174 = vunpack.c.h.b16 %v78
    %v175 = vunpack.c.l.b16 %v79
    %v176 = vunpack.c.h.b16 %v79
    %v177 = vunpack.c.l.b16 %v80
    %v178 = vunpack.c.h.b16 %v80
    %v179 = vunpack.c.l.b16 %v81
    %v180 = vunpack.c.h.b16 %v81
    %v181 = vunpack.c.l.b16 %v82
    %v182 = vunpack.c.h.b16 %v82
    %v183 = vunpack.c.l.b16 %v83
    %v184 = vunpack.c.h.b16 %v83
    %v185 = vunpack.c.l.b16 %v84
    %v186 = vunpack.c.h.b16 %v84
    %v187 = vunpack.c.l.b16 %v85
    %v188 = vunpack.c.h.b16 %v85
    %v189 = vunpack.c.l.b16 %v86
    %v190 = vunpack.c.h.b16 %v86
    %v191 = vunpack.c.l.b16 %v87
    %v192 = vunpack.c.h.b16 %v87
    %v193 = vunpack.c.l.b16 %v88
    %v194 = vunpack.c.h.b16 %v88
    %v195 = vunpack.c.l.b16 %v89
    %v196 = vunpack.c.h.b16 %v89
    %v197 = vunpack.c.l.b16 %v90
    %v198 = vunpack.c.h.b16 %v90
    %v199 = vpack.c.b16 %v137, %v135
    %v200 = vpack.c.b16 %v138, %v136
    %v201 = vpack.c.b16 %v141, %v139
    %v202 = vpack.c.b16 %v142, %v140
    %v203 = vpack.c.b16 %v145, %v143
    %v204 = vpack.c.b16 %v146, %v144
    %v205 = vpack.c.b16 %v149, %v147
    %v206 = vpack.c.b16 %v150, %v148
    %v207 = vpack.c.b16 %v153, %v151
    %v208 = vpack.c.b16 %v154, %v152
    %v209 = vpack.c.b16 %v157, %v155
    %v210 = vpack.c.b16 %v158, %v156
    %v211 = vpack.c.b16 %v161, %v159
    %v212 = vpack.c.b16 %v162, %v160
    %v213 = vpack.c.b16 %v165, %v163
    %v214 = vpack.c.b16 %v166, %v164
    %v215 = vpack.c.b16 %v169, %v167
    %v216 = vpack.c.b16 %v170, %v168
    %v217 = vpack.c.b16 %v173, %v171
    %v218 = vpack.c.b16 %v174, %v172
    %v219 = vpack.c.b16 %v177, %v175
    %v220 = vpack.c.b16 %v178, %v176
    %v221 = vpack.c.b16 %v181, %v179
    %v222 = vpack.c.b16 %v182, %v180
    %v223 = vpack.c.b16 %v185, %v183
    %v224 = vpack.c.b16 %v186, %v184
    %v225 = vpack.c.b16 %v189, %v187
    %v226 = vpack.c.b16 %v190, %v188
    %v227 = vpack.c.b16 %v193, %v191
    %v228 = vpack.c.b16 %v194, %v192
    %v229 = vpack.c.b16 %v197, %v195
    %v230 = vpack.c.b16 %v198, %v196
    %263 = vmatprep.subr.bf16.mxu0 %v200
    %264 = vmatpush1.bf16.msra.mxu0 %v199
    %265 = vmatprep.subr.bf16.mxu0 %v202
    %266 = vmatpush1.bf16.msra.mxu0 %v201
    %267 = vmatprep.subr.bf16.mxu0 %v204
    %268 = vmatpush1.bf16.msra.mxu0 %v203
    %269 = vmatprep.subr.bf16.mxu0 %v206
    %270 = vmatpush1.bf16.msra.mxu0 %v205
    %271 = vmatprep.subr.bf16.mxu0 %v208
    %272 = vmatpush1.bf16.msra.mxu0 %v207
    %273 = vmatprep.subr.bf16.mxu0 %v210
    %274 = vmatpush1.bf16.msra.mxu0 %v209
    %275 = vmatprep.subr.bf16.mxu0 %v212
    %276 = vmatpush1.bf16.msra.mxu0 %v211
    %277 = vmatprep.subr.bf16.mxu0 %v214
    %278 = vmatpush1.bf16.msra.mxu0 %v213
    %279 = vmatprep.subr.bf16.mxu0 %v216
    %280 = vmatpush1.bf16.msra.mxu0 %v215
    %281 = vmatprep.subr.bf16.mxu0 %v218
    %282 = vmatpush1.bf16.msra.mxu0 %v217
    %283 = vmatprep.subr.bf16.mxu0 %v220
    %284 = vmatpush1.bf16.msra.mxu0 %v219
    %285 = vmatprep.subr.bf16.mxu0 %v222
    %286 = vmatpush1.bf16.msra.mxu0 %v221
    %287 = vmatprep.subr.bf16.mxu0 %v224
    %288 = vmatpush1.bf16.msra.mxu0 %v223
    %289 = vmatprep.subr.bf16.mxu0 %v226
    %290 = vmatpush1.bf16.msra.mxu0 %v225
    %291 = vmatprep.subr.bf16.mxu0 %v228
    %292 = vmatpush1.bf16.msra.mxu0 %v227
    %293 = vmatprep.subr.bf16.mxu0 %v230
    %294 = vmatpush1.bf16.msra.mxu0 %v229
    %295 = vmatprep.mubr.bf16.mxu0 %v58
    %296 = vmatmul.mubr.bf16.gmra.mrb[0].mxu0 %v57
    %v297 = vpop.f32.mrb[0].mxu0
    %v298 = vadd.f32 %v96, %v297
    %v299 = vpop.f32.mrb[0].mxu0
    %v300 = vadd.f32 %v100, %v299
    %v301 = vpop.f32.mrb[0].mxu0
    %v302 = vpop.f32.mrb[0].mxu0
    %303 = vdwg.mxu0
    %v304 = vxor.u32 %v300, 2147483648
    %v305 = vmul.f32 %v304, 1.442695
    %v306 = vpow.pop %v305
    %v307 = vadd.f32 %v306, 1.0
    %v308 = vrcp.pop %v307
    %v309 = vmul.f32 1.0, %v308
    %v310 = vmul.f32 %v300, %v309
    %v311 = vmul.f32 %v298, %v310
    %v312 = vpack.c.bf16 %v311, %v311
    %v313 = vld [vmem:[#allocation4] sm:$0xff]
    %v314 = vld [vmem:[#allocation4 + $0x8] sm:$0xff]
    %v315 = vld [vmem:[#allocation4 + $0x10] sm:$0xff]
    %v316 = vld [vmem:[#allocation4 + $0x18] sm:$0xff]
    %v317 = vld [vmem:[#allocation4 + $0x20] sm:$0xff]
    %v318 = vld [vmem:[#allocation4 + $0x28] sm:$0xff]
    %v319 = vld [vmem:[#allocation4 + $0x30] sm:$0xff]
    %v320 = vld [vmem:[#allocation4 + $0x38] sm:$0xff]
    %v321 = vld [vmem:[#allocation4 + $0x40] sm:$0xff]
    %v322 = vld [vmem:[#allocation4 + $0x48] sm:$0xff]
    %v323 = vld [vmem:[#allocation4 + $0x50] sm:$0xff]
    %v324 = vld [vmem:[#allocation4 + $0x58] sm:$0xff]
    %v325 = vld [vmem:[#allocation4 + $0x60] sm:$0xff]
    %v326 = vld [vmem:[#allocation4 + $0x68] sm:$0xff]
    %v327 = vld [vmem:[#allocation4 + $0x70] sm:$0xff]
    %v328 = vld [vmem:[#allocation4 + $0x78] sm:$0xff]
    %v329 = vld [vmem:[%s5] sm:$0x3]
    %v331 = vlaneseq
    %v332 = vshrl.u32 %v331, 7
    %v333 = vsub.s32 0, %v332
    %v334 = vrot.slane %v329, %v333
    %v335 = vlaneseq
    %v336 = vshrl.u32 %v335, 7
    %v337 = vsub.s32 1, %v336
    %v338 = vrot.slane %v329, %v337
    %v357 = vunpack.c.l.b16 %v313
    %v358 = vunpack.c.h.b16 %v313
    %v359 = vunpack.c.l.b16 %v314
    %v360 = vunpack.c.h.b16 %v314
    %v361 = vunpack.c.l.b16 %v315
    %v362 = vunpack.c.h.b16 %v315
    %v363 = vunpack.c.l.b16 %v316
    %v364 = vunpack.c.h.b16 %v316
    %v365 = vunpack.c.l.b16 %v317
    %v366 = vunpack.c.h.b16 %v317
    %v367 = vunpack.c.l.b16 %v318
    %v368 = vunpack.c.h.b16 %v318
    %v369 = vunpack.c.l.b16 %v319
    %v370 = vunpack.c.h.b16 %v319
    %v371 = vunpack.c.l.b16 %v320
    %v372 = vunpack.c.h.b16 %v320
    %v373 = vunpack.c.l.b16 %v321
    %v374 = vunpack.c.h.b16 %v321
    %v375 = vunpack.c.l.b16 %v322
    %v376 = vunpack.c.h.b16 %v322
    %v377 = vunpack.c.l.b16 %v323
    %v378 = vunpack.c.h.b16 %v323
    %v379 = vunpack.c.l.b16 %v324
    %v380 = vunpack.c.h.b16 %v324
    %v381 = vunpack.c.l.b16 %v325
    %v382 = vunpack.c.h.b16 %v325
    %v383 = vunpack.c.l.b16 %v326
    %v384 = vunpack.c.h.b16 %v326
    %v385 = vunpack.c.l.b16 %v327
    %v386 = vunpack.c.h.b16 %v327
    %v387 = vunpack.c.l.b16 %v328
    %v388 = vunpack.c.h.b16 %v328
    %v389 = vpack.c.b16 %v359, %v357
    %v390 = vpack.c.b16 %v360, %v358
    %v391 = vpack.c.b16 %v363, %v361
    %v392 = vpack.c.b16 %v364, %v362
    %v393 = vpack.c.b16 %v367, %v365
    %v394 = vpack.c.b16 %v368, %v366
    %v395 = vpack.c.b16 %v371, %v369
    %v396 = vpack.c.b16 %v372, %v370
    %v397 = vpack.c.b16 %v375, %v373
    %v398 = vpack.c.b16 %v376, %v374
    %v399 = vpack.c.b16 %v379, %v377
    %v400 = vpack.c.b16 %v380, %v378
    %v401 = vpack.c.b16 %v383, %v381
    %v402 = vpack.c.b16 %v384, %v382
    %v403 = vpack.c.b16 %v387, %v385
    %v404 = vpack.c.b16 %v388, %v386
    %421 = vmatprep.subr.bf16.mxu0 %v390
    %422 = vmatpush1.bf16.msra.mxu0 %v389
    %423 = vmatprep.subr.bf16.mxu0 %v392
    %424 = vmatpush1.bf16.msra.mxu0 %v391
    %425 = vmatprep.subr.bf16.mxu0 %v394
    %426 = vmatpush1.bf16.msra.mxu0 %v393
    %427 = vmatprep.subr.bf16.mxu0 %v396
    %428 = vmatpush1.bf16.msra.mxu0 %v395
    %429 = vmatprep.subr.bf16.mxu0 %v398
    %430 = vmatpush1.bf16.msra.mxu0 %v397
    %431 = vmatprep.subr.bf16.mxu0 %v400
    %432 = vmatpush1.bf16.msra.mxu0 %v399
    %433 = vmatprep.subr.bf16.mxu0 %v402
    %434 = vmatpush1.bf16.msra.mxu0 %v401
    %435 = vmatprep.subr.bf16.mxu0 %v404
    %436 = vmatpush1.bf16.msra.mxu0 %v403
    %437 = vmatprep.subr.bf16.mxu0 0
    %438 = vmatpush1.bf16.msra.mxu0 0
    %439 = vmatprep.subr.bf16.mxu0 0
    %440 = vmatpush1.bf16.msra.mxu0 0
    %441 = vmatprep.subr.bf16.mxu0 0
    %442 = vmatpush1.bf16.msra.mxu0 0
    %443 = vmatprep.subr.bf16.mxu0 0
    %444 = vmatpush1.bf16.msra.mxu0 0
    %445 = vmatprep.subr.bf16.mxu0 0
    %446 = vmatpush1.bf16.msra.mxu0 0
    %447 = vmatprep.subr.bf16.mxu0 0
    %448 = vmatpush1.bf16.msra.mxu0 0
    %449 = vmatprep.subr.bf16.mxu0 0
    %450 = vmatpush1.bf16.msra.mxu0 0
    %451 = vmatprep.subr.bf16.mxu0 0
    %452 = vmatpush1.bf16.msra.mxu0 0
    %453 = vmatprep.mubr.bf16.mxu0 0
    %454 = vmatmul.mubr.bf16.gmra.mrb[0].mxu0 %v312
    %v455 = vpop.f32.mrb[0].mxu0
    %v456 = vadd.f32 %v334, %v455
    %v457 = vpop.f32.mrb[0].mxu0
    %v458 = vadd.f32 %v338, %v457
    %v459 = vpop.f32.mrb[0].mxu0
    %v460 = vpop.f32.mrb[0].mxu0
    %461 = vdwg.mxu0
    %v462 = vadd.f32 %v55, %v456
    %v463 = vadd.f32 %v56, %v458
    %v464 = vmul.f32 %v462, %v462
    %v465 = vmul.f32 %v463, %v463
    %v466 = vadd.f32 %v464, %v465
    %467 = vadd.xlane.f32.xlu0 %v466
    %v468 = vpop.xlane.xlu0 %467
    %v469 = vmax.f32 %v468, 3.2e-15
    %v470 = vrsqrt.pop %v469
    %v471 = vmul.f32 %v470, 5.656854
    %v472 = vmul.f32 %v462, %v471
    %v473 = vmul.f32 %v463, %v471
    %v474 = vld [vmem:[%s6] sm:$0x3]
    %v476 = vlaneseq
    %v477 = vshrl.u32 %v476, 7
    %v478 = vsub.s32 0, %v477
    %v479 = vrot.slane %v474, %v478
    %v480 = vlaneseq
    %v481 = vshrl.u32 %v480, 7
    %v482 = vsub.s32 1, %v481
    %v483 = vrot.slane %v474, %v482
    %v486 = vmul.f32 %v472, %v479
    %v487 = vmul.f32 %v473, %v483
    %488 = vst [vmem:[%s7] sm:$0xff] %v486
    %489 = vst [vmem:[%s7 + $0x8] sm:$0xff] %v487
    // Predicated region
    $region38: #{mlp_adapter_forward.1} parent=1 // pred_check
      _
    $region39: #{mlp_adapter_forward.1} parent=1 // pred_check_branch
      %491 = sbr.rel (0) target = $region41
    $region40: #{mlp_adapter_forward.1} parent=1 // pred_region
      _
    $region41: #{mlp_adapter_forward.1} parent=1 // pred_fallthru
      _
    // Predicated region
    $region42: #{mlp_adapter_forward.1} parent=1 // pred_check
      _
    $region43: #{mlp_adapter_forward.1} parent=1 // pred_check_branch
      %493 = sbr.rel (0) target = $region45
    $region44: #{mlp_adapter_forward.1} parent=1 // pred_region
      _
    $region45: #{mlp_adapter_forward.1} parent=1 // pred_fallthru
      _
    %494 = vsyncpa [#allocation3], 1
    %495 = vsyncpa [#allocation5], 1

</llo_original>
